<compile_context>
chip_gen: v5e
topology: v5e:2x2
jax: 0.10.0
libtpu: 0.0.40
codegen_flags: <defaults>
</compile_context>

<pallas_src>
import functools

import jax
import jax.numpy as jnp
from jax.experimental import pallas as pl
from jax.experimental.pallas import tpu as pltpu


# ---------------------------------------------------------------------------
# Helpers
# ---------------------------------------------------------------------------
def _round_up(n, m):
    return ((n + m - 1) // m) * m


def _round_up_lane(n):
    # 256-multiples feed the 256-wide MXU on v6e/v7x; 128 for smaller dims
    # (and is native for v5e's 128x128 MXU).
    return _round_up(n, 256 if n >= 256 else 128)


def _pad2d(a, rows, cols):
    r, c = a.shape
    if r == rows and c == cols:
        return a
    return jnp.pad(a, ((0, rows - r), (0, cols - c)))


def _vmem_budget_bytes():
    """Generation-aware VMEM budget: physical capacity minus compiler headroom."""
    cap = 64 << 20  # conservative fallback (v7x per-TC)
    try:
        info = pltpu.get_tpu_info()
        cap = int(getattr(info, "vmem_capacity_bytes", cap)) or cap
    except Exception:
        pass
    return max(cap - (12 << 20), cap * 3 // 4)


def _footprint(tm, th, k_p, o_p, x_isz, w_isz, o_isz):
    """Per-grid-step VMEM estimate, counting default 2x buffering of every block."""
    dbuf = 2 * (tm * k_p * x_isz          # x tile
                + k_p * th * w_isz        # w1 chunk
                + th * 4                  # b1 chunk (f32)
                + th * o_p * w_isz        # w2 chunk
                + o_p * 4                 # b2 (f32)
                + tm * o_p * o_isz)       # out tile
    return dbuf + tm * o_p * 4 + tm * th * 4   # f32 acc scratch + staged h


def _select_tiles(B, K_p, H_p, O_p, x_isz, w_isz, o_isz, sub, block_m, budget):
    """Pick the batch tile TM and hidden chunk TH from the VMEM budget."""
    TM = min(_round_up(block_m, sub), _round_up(B, sub))
    n128 = H_p // 128
    TH = 128
    # Largest multiple of 128 that divides H_p and fits the budget.
    for m in range(n128, 0, -1):
        if n128 % m == 0:
            TH = 128 * m
            if _footprint(TM, TH, K_p, O_p, x_isz, w_isz, o_isz) <= budget:
                break
    # If even the smallest hidden chunk is too big, shrink the batch tile.
    while _footprint(TM, TH, K_p, O_p, x_isz, w_isz, o_isz) > budget and TM > sub:
        TM = max(sub, _round_up(TM // 2, sub))
    return TM, TH


# ---------------------------------------------------------------------------
# Kernel
# ---------------------------------------------------------------------------
def _mlp_kernel(x_ref, w1_ref, b1_ref, w2_ref, b2_ref, o_ref, acc_ref):
    """One (batch tile, hidden chunk) step of relu(x@w1+b1)@w2 + b2."""
    h_idx = pl.program_id(1)

    @pl.when(h_idx == 0)
    def _init():
        acc_ref[...] = jnp.zeros_like(acc_ref)

    # fc1 chunk: MXU matmul with f32 accumulation; bias + ReLU on the VPU.
    h = jnp.dot(x_ref[...], w1_ref[...], preferred_element_type=jnp.float32)
    h = jnp.maximum(h + b1_ref[...], 0.0)

    # fc2 chunk, accumulated into the resident f32 scratch.
    acc_ref[...] += jnp.dot(h.astype(w2_ref.dtype), w2_ref[...],
                            preferred_element_type=jnp.float32)

    @pl.when(h_idx == pl.num_programs(1) - 1)
    def _finalize():
        o_ref[...] = (acc_ref[...] + b2_ref[...]).astype(o_ref.dtype)


# ---------------------------------------------------------------------------
# Jitted forward (padded params are passed in; only x pad/slice happens per call)
# ---------------------------------------------------------------------------
@functools.partial(jax.jit, static_argnames=("out_features", "block_m"))
def _simplenet_apply(x, w1_p, b1_p, w2_p, b2_p, *, out_features, block_m):
    B, K = x.shape
    K_p, H_p = w1_p.shape
    O_p = w2_p.shape[1]
    assert K <= K_p, "input feature dim exceeds the padded weight"

    cdt = w1_p.dtype                  # compute dtype for the MXU operands
    out_dtype = x.dtype
    x_isz = jnp.dtype(cdt).itemsize
    w_isz = jnp.dtype(cdt).itemsize
    o_isz = jnp.dtype(out_dtype).itemsize
    sub = {4: 8, 2: 16, 1: 32}.get(x_isz, 8)

    budget = _vmem_budget_bytes()
    TM, TH = _select_tiles(B, K_p, H_p, O_p, x_isz, w_isz, o_isz, sub, block_m,
                           budget)
    B_p = _round_up(B, TM)
    grid = (B_p // TM, H_p // TH)

    x_pad = _pad2d(x.astype(cdt), B_p, K_p)

    footprint = _footprint(TM, TH, K_p, O_p, x_isz, w_isz, o_isz)
    vmem_limit = int(min(max(footprint * 3 // 2, 4 << 20), budget))

    cost = pl.CostEstimate(
        flops=2 * B_p * (K_p * H_p + H_p * O_p),
        transcendentals=0,
        bytes_accessed=(B_p * K_p * x_isz + K_p * H_p * w_isz + H_p * 4
                        + H_p * O_p * w_isz + O_p * 4 + B_p * O_p * o_isz),
    )

    out_p = pl.pallas_call(
        _mlp_kernel,
        out_shape=jax.ShapeDtypeStruct((B_p, O_p), out_dtype),
        grid_spec=pltpu.PrefetchScalarGridSpec(
            num_scalar_prefetch=0,
            grid=grid,
            in_specs=[
                pl.BlockSpec((TM, K_p), lambda i, h: (i, 0)),   # x: batch-tiled
                pl.BlockSpec((K_p, TH), lambda i, h: (0, h)),   # w1: hidden-chunked
                pl.BlockSpec((1, TH), lambda i, h: (0, h)),     # b1: hidden-chunked
                pl.BlockSpec((TH, O_p), lambda i, h: (h, 0)),   # w2: hidden-chunked
                pl.BlockSpec((1, O_p), lambda i, h: (0, 0)),    # b2: resident
            ],
            out_specs=pl.BlockSpec((TM, O_p), lambda i, h: (i, 0)),
            scratch_shapes=[pltpu.VMEM((TM, O_p), jnp.float32)],
        ),
        compiler_params=pltpu.CompilerParams(
            dimension_semantics=("parallel", "arbitrary"),
            vmem_limit_bytes=vmem_limit,
        ),
        cost_estimate=cost,
    )(x_pad, w1_p, b1_p, w2_p, b2_p)

    return out_p[:B, :out_features]


# ---------------------------------------------------------------------------
# Public factory: pad/cast parameters once, return a jitted forward.
# ---------------------------------------------------------------------------
def make_simplenet(w1, b1, w2, b2, *, block_m=512, compute_dtype=None):
    """Returns forward(x) = relu(x @ w1 + b1) @ w2 + b2 as a fused Pallas kernel.

    Parameters are zero-padded (exact: padded hidden cols give relu(0)=0 against
    zero w2 rows; padded batch rows / output cols are sliced off) and optionally
    cast to `compute_dtype` (e.g. bf16 for MXU throughput) exactly once.
    """
    K, H = w1.shape
    O = w2.shape[1]
    cdt = jnp.dtype(compute_dtype) if compute_dtype is not None else jnp.dtype(w1.dtype)

    K_p, H_p, O_p = _round_up_lane(K), _round_up_lane(H), _round_up_lane(O)
    w1_p = _pad2d(jnp.asarray(w1, cdt), K_p, H_p)
    b1_p = _pad2d(jnp.reshape(b1, (1, -1)).astype(jnp.float32), 1, H_p)
    w2_p = _pad2d(jnp.asarray(w2, cdt), H_p, O_p)
    b2_p = _pad2d(jnp.reshape(b2, (1, -1)).astype(jnp.float32), 1, O_p)

    def forward(x):
        return _simplenet_apply(x, w1_p, b1_p, w2_p, b2_p,
                                out_features=O, block_m=block_m)

    return forward


def init_params(key, input_size, hidden_size, output_size, dtype=jnp.float32):
    """Deterministic init mirroring nn.Linear's U(-1/sqrt(fan_in), 1/sqrt(fan_in))."""
    k1, k2, k3, k4 = jax.random.split(key, 4)
    bound1 = 1.0 / (input_size ** 0.5)
    bound2 = 1.0 / (hidden_size ** 0.5)
    w1 = jax.random.uniform(k1, (input_size, hidden_size), dtype, -bound1, bound1)
    b1 = jax.random.uniform(k2, (hidden_size,), dtype, -bound1, bound1)
    w2 = jax.random.uniform(k3, (hidden_size, output_size), dtype, -bound2, bound2)
    b2 = jax.random.uniform(k4, (output_size,), dtype, -bound2, bound2)
    return w1, b1, w2, b2


if __name__ == "__main__":
    input_size, hidden_size, output_size = 32, 64, 16
    batch = 8

    key = jax.random.PRNGKey(0)
    kx, kp = jax.random.split(key)
    x = jax.random.normal(kx, (batch, input_size), jnp.float32)
    w1, b1, w2, b2 = init_params(kp, input_size, hidden_size, output_size)

    # Params padded once; forward is jitted.
    forward = make_simplenet(w1, b1, w2, b2)
    out = jax.block_until_ready(forward(x))
    ref = jnp.maximum(x @ w1 + b1, 0.0) @ w2 + b2
    assert out.shape == (batch, output_size)
    assert jnp.allclose(out, ref, atol=1e-5, rtol=1e-5)

    # Exercise the multi-tile batch path (grid > 1, non-divisible batch).
    batch2 = 200
    x2 = jax.random.normal(jax.random.PRNGKey(1), (batch2, input_size), jnp.float32)
    forward_tiled = make_simplenet(w1, b1, w2, b2, block_m=128)
    out2 = jax.block_until_ready(forward_tiled(x2))
    ref2 = jnp.maximum(x2 @ w1 + b1, 0.0) @ w2 + b2
    assert out2.shape == (batch2, output_size)
    assert jnp.allclose(out2, ref2, atol=1e-5, rtol=1e-5)

    # bf16 MXU-operand path (f32 accumulate, f32 bias/ReLU, f32 output).
    forward_bf16 = make_simplenet(w1, b1, w2, b2, compute_dtype=jnp.bfloat16)
    out3 = jax.block_until_ready(forward_bf16(x))
    assert out3.shape == (batch, output_size)
    assert jnp.allclose(out3, ref, atol=5e-2, rtol=5e-2)

    print("KERNEL_OK")
</pallas_src>

<mosaic_0001>
module attributes {stable_mosaic.version = 11 : i64} {
  func.func @_mlp_kernel(%arg0: i32, %arg1: i32, %arg2: memref<8x128xf32, #tpu.memory_space<vmem>>, %arg3: memref<128x128xf32, #tpu.memory_space<vmem>>, %arg4: memref<1x128xf32, #tpu.memory_space<vmem>>, %arg5: memref<128x128xf32, #tpu.memory_space<vmem>>, %arg6: memref<1x128xf32, #tpu.memory_space<vmem>>, %arg7: memref<8x128xf32, #tpu.memory_space<vmem>>, %arg8: memref<8x128xf32, #tpu.memory_space<vmem>>) attributes {dimension_semantics = [#tpu.dimension_semantics<parallel>, #tpu.dimension_semantics<arbitrary>], iteration_bounds = array<i64: 1, 1>, scalar_prefetch = 0 : i64, scratch_operands = 1 : i64, tpu.core_type = #tpu.core_type<tc>, window_params = [{transform_indices = @transform_0, window_bounds = array<i64: 8, 128>}, {transform_indices = @transform_1, window_bounds = array<i64: 128, 128>}, {transform_indices = @transform_2, window_bounds = array<i64: 1, 128>}, {transform_indices = @transform_3, window_bounds = array<i64: 128, 128>}, {pipeline_mode = #tpu.pipeline_mode<synchronous>, transform_indices = @transform_4, window_bounds = array<i64: 1, 128>}, {transform_indices = @transform_5, window_bounds = array<i64: 8, 128>}]} {
    %c0_i32 = arith.constant 0 : i32
    %0 = arith.cmpi eq, %arg1, %c0_i32 : i32
    %1 = arith.extui %0 : i1 to i32
    %c0_i32_0 = arith.constant 0 : i32
    %2 = arith.cmpi ne, %1, %c0_i32_0 : i32
    scf.if %2 {
      %cst_16 = arith.constant 0.000000e+00 : f32
      %19 = vector.broadcast %cst_16 : f32 to vector<8x128xf32>
      %c0_17 = arith.constant 0 : index
      %c0_18 = arith.constant 0 : index
      %20 = vector.load %arg8[%c0_17, %c0_18] : memref<8x128xf32, #tpu.memory_space<vmem>>, vector<8x128xf32>
      tpu.vector_store %arg8[%c0_17, %c0_18], %19 {strides = array<i32>} : memref<8x128xf32, #tpu.memory_space<vmem>>, vector<8x128xf32>,
    } else {
    }
    %c0 = arith.constant 0 : index
    %c0_1 = arith.constant 0 : index
    %3 = vector.load %arg2[%c0, %c0_1] : memref<8x128xf32, #tpu.memory_space<vmem>>, vector<8x128xf32>
    %c0_2 = arith.constant 0 : index
    %c0_3 = arith.constant 0 : index
    %4 = vector.load %arg3[%c0_2, %c0_3] : memref<128x128xf32, #tpu.memory_space<vmem>>, vector<128x128xf32>
    %cst = arith.constant dense<0.000000e+00> : vector<8x128xf32>
    %5 = tpu.matmul %3, %4, %cst {dimension_numbers = #tpu.dot_dimension_numbers<[1], [0], [0], [1], [0, 0, 1, 1], [], []>} : vector<8x128xf32>, vector<128x128xf32>, vector<8x128xf32> -> vector<8x128xf32>
    %c0_4 = arith.constant 0 : index
    %c0_5 = arith.constant 0 : index
    %6 = vector.load %arg4[%c0_4, %c0_5] : memref<1x128xf32, #tpu.memory_space<vmem>>, vector<1x128xf32>
    %7 = vector.broadcast %6 : vector<1x128xf32> to vector<8x128xf32>
    %8 = arith.addf %5, %7 : vector<8x128xf32>
    %cst_6 = arith.constant 0.000000e+00 : f32
    %9 = vector.broadcast %cst_6 : f32 to vector<8x128xf32>
    %10 = arith.maximumf %8, %9 : vector<8x128xf32>
    %c0_7 = arith.constant 0 : index
    %c0_8 = arith.constant 0 : index
    %11 = vector.load %arg8[%c0_7, %c0_8] : memref<8x128xf32, #tpu.memory_space<vmem>>, vector<8x128xf32>
    %c0_9 = arith.constant 0 : index
    %c0_10 = arith.constant 0 : index
    %12 = vector.load %arg5[%c0_9, %c0_10] : memref<128x128xf32, #tpu.memory_space<vmem>>, vector<128x128xf32>
    %cst_11 = arith.constant dense<0.000000e+00> : vector<8x128xf32>
    %13 = tpu.matmul %10, %12, %cst_11 {dimension_numbers = #tpu.dot_dimension_numbers<[1], [0], [0], [1], [0, 0, 1, 1], [], []>} : vector<8x128xf32>, vector<128x128xf32>, vector<8x128xf32> -> vector<8x128xf32>
    %14 = arith.addf %11, %13 : vector<8x128xf32>
    %c0_12 = arith.constant 0 : index
    %c0_13 = arith.constant 0 : index
    %15 = vector.load %arg8[%c0_12, %c0_13] : memref<8x128xf32, #tpu.memory_space<vmem>>, vector<8x128xf32>
    tpu.vector_store %arg8[%c0_12, %c0_13], %14 {strides = array<i32>} : memref<8x128xf32, #tpu.memory_space<vmem>>, vector<8x128xf32>,
    %c0_i32_14 = arith.constant 0 : i32
    %16 = arith.cmpi eq, %arg1, %c0_i32_14 : i32
    %17 = arith.extui %16 : i1 to i32
    %c0_i32_15 = arith.constant 0 : i32
    %18 = arith.cmpi ne, %17, %c0_i32_15 : i32
    scf.if %18 {
      %c0_16 = arith.constant 0 : index
      %c0_17 = arith.constant 0 : index
      %19 = vector.load %arg8[%c0_16, %c0_17] : memref<8x128xf32, #tpu.memory_space<vmem>>, vector<8x128xf32>
      %c0_18 = arith.constant 0 : index
      %c0_19 = arith.constant 0 : index
      %20 = vector.load %arg6[%c0_18, %c0_19] : memref<1x128xf32, #tpu.memory_space<vmem>>, vector<1x128xf32>
      %21 = vector.broadcast %20 : vector<1x128xf32> to vector<8x128xf32>
      %22 = arith.addf %19, %21 : vector<8x128xf32>
      %c0_20 = arith.constant 0 : index
      %c0_21 = arith.constant 0 : index
      %23 = vector.load %arg7[%c0_20, %c0_21] : memref<8x128xf32, #tpu.memory_space<vmem>>, vector<8x128xf32>
      tpu.vector_store %arg7[%c0_20, %c0_21], %22 {strides = array<i32>} : memref<8x128xf32, #tpu.memory_space<vmem>>, vector<8x128xf32>,
    } else {
    }
    return
  }
  func.func @transform_0(%arg0: i32, %arg1: i32) -> (i32, i32) {
    %c0_i32 = arith.constant 0 : i32
    %c0_i32_0 = arith.constant 0 : i32
    return %arg0, %c0_i32 : i32, i32
  }
  func.func @transform_1(%arg0: i32, %arg1: i32) -> (i32, i32) {
    %c0_i32 = arith.constant 0 : i32
    %c0_i32_0 = arith.constant 0 : i32
    return %c0_i32, %arg1 : i32, i32
  }
  func.func @transform_2(%arg0: i32, %arg1: i32) -> (i32, i32) {
    %c0_i32 = arith.constant 0 : i32
    %c0_i32_0 = arith.constant 0 : i32
    return %c0_i32, %arg1 : i32, i32
  }
  func.func @transform_3(%arg0: i32, %arg1: i32) -> (i32, i32) {
    %c0_i32 = arith.constant 0 : i32
    %c0_i32_0 = arith.constant 0 : i32
    return %arg1, %c0_i32 : i32, i32
  }
  func.func @transform_4(%arg0: i32, %arg1: i32) -> (i32, i32) {
    %c0_i32 = arith.constant 0 : i32
    %c0_i32_0 = arith.constant 0 : i32
    %c0_i32_1 = arith.constant 0 : i32
    return %c0_i32, %c0_i32_0 : i32, i32
  }
  func.func @transform_5(%arg0: i32, %arg1: i32) -> (i32, i32) {
    %c0_i32 = arith.constant 0 : i32
    %c0_i32_0 = arith.constant 0 : i32
    return %arg0, %c0_i32 : i32, i32
  }
}

</mosaic_0001>

<llo_original>
// kernel: _simplenet_apply.1
$region0: #{_simplenet_apply.1}
  #allocation0 [shape = 'u32[]', space=smem, size = 0x4, offset = 0x4, fixed_abs, tag = 'smem constant byte address 0x4 - core index']
  #allocation1 [shape = 'u32[72,128]{1,0:T(1,128)}', space=vmem, size = 0x9000, scoped, tag = 'internal scratch']
  #allocation2 [shape = 'f32[8,128]{1,0:T(8,128)}', space=vmem, size = 0x1000, scoped, tag = 'scratch operand']
  %s0 = inlined_call_operand.vmem [shape: f32[8,128], index: 0, kind: input, shape index: {}]
  %s1 = inlined_call_operand.hbm [shape: f32[128,128], index: 1, kind: input, shape index: {}]
  %s2 = inlined_call_operand.vmem [shape: f32[1,128], index: 2, kind: input, shape index: {}]
  %s3 = inlined_call_operand.hbm [shape: f32[128,128], index: 3, kind: input, shape index: {}]
  %s4 = inlined_call_operand.vmem [shape: f32[1,128], index: 4, kind: input, shape index: {}]
  %s5 = inlined_call_operand.hbm [shape: f32[8,128], index: 5, kind: output, shape index: {}]
  %s6 = sld [smem:[#allocation0]]
  $region46: #{_simplenet_apply.1} parent=0
    _
  %s8 = ssub.s32 1, %s6
  %s9 = scalar_select 0, %s8, %s6
  $region1: #{_simplenet_apply.1} parent=0
    #allocation3 [shape = 'u8[65536]{0}', space=vmem, size = 0x10000, scoped, tag = 'input window, operand 1, single buffered']
    #allocation4 [shape = 's32[1]{0}', space=sflag, size = 0x4, scoped, tag = 'scoped memory for _simplenet_apply.1']
    #allocation5 [shape = 's32[1]{0}', space=sflag, size = 0x4, scoped, tag = 'scoped memory for _simplenet_apply.1']
    #allocation6 [shape = 'u8[65536]{0}', space=vmem, size = 0x10000, scoped, tag = 'input window, operand 3, single buffered']
    #allocation7 [shape = 's32[1]{0}', space=sflag, size = 0x4, scoped, tag = 'scoped memory for _simplenet_apply.1']
    #allocation8 [shape = 'u8[4096]{0}', space=vmem, size = 0x1000, scoped, tag = 'output window, operand 0, single buffered']
    %10 = vsyncpa [#allocation4], 0
    %11 = vsyncpa [#allocation7], 0
    %12 = vsyncpa [#allocation5], 0
    // Predicated region
    $region2: #{_simplenet_apply.1} parent=1 // pred_check
      _
    $region3: #{_simplenet_apply.1} parent=1 // pred_check_branch
      %14 = sbr.rel (0) target = $region5
    $region4: #{_simplenet_apply.1} parent=1 // pred_region
      _
    $region5: #{_simplenet_apply.1} parent=1 // pred_fallthru
      _
    // Predicated region
    $region6: #{_simplenet_apply.1} parent=1 // pred_check
      _
    $region7: #{_simplenet_apply.1} parent=1 // pred_check_branch
      %16 = sbr.rel (0) target = $region9
    $region8: #{_simplenet_apply.1} parent=1 // pred_region
      %18 = vsyncadd [#allocation4], 0
      %s19 = sshll.u32 %s1, 4
      %s20 = int_to_ptr.hbm [resolvable:$true] %s19
      %s21 = sshll.u32 [#allocation3], 4
      %s22 = int_to_ptr.vmem [resolvable:$true] %s21
      %27 = dma.hbm_to_vmem [thread:$0]  %s20, 2048, %s22, [#allocation4], 128, 128, 8
    $region9: #{_simplenet_apply.1} parent=1 // pred_fallthru
      _
    // Predicated region
    $region10: #{_simplenet_apply.1} parent=1 // pred_check
      _
    $region11: #{_simplenet_apply.1} parent=1 // pred_check_branch
      %29 = sbr.rel (0) target = $region13
    $region12: #{_simplenet_apply.1} parent=1 // pred_region
      _
    $region13: #{_simplenet_apply.1} parent=1 // pred_fallthru
      _
    // Predicated region
    $region14: #{_simplenet_apply.1} parent=1 // pred_check
      _
    $region15: #{_simplenet_apply.1} parent=1 // pred_check_branch
      %31 = sbr.rel (0) target = $region17
    $region16: #{_simplenet_apply.1} parent=1 // pred_region
      %33 = vsyncadd [#allocation7], 0
      %s34 = sshll.u32 %s3, 4
      %s35 = int_to_ptr.hbm [resolvable:$true] %s34
      %s36 = sshll.u32 [#allocation6], 4
      %s37 = int_to_ptr.vmem [resolvable:$true] %s36
      %42 = dma.hbm_to_vmem [thread:$0]  %s35, 2048, %s37, [#allocation7], 128, 128, 8
    $region17: #{_simplenet_apply.1} parent=1 // pred_fallthru
      _
    // Predicated region
    $region18: #{_simplenet_apply.1} parent=1 // pred_check
      _
    $region19: #{_simplenet_apply.1} parent=1 // pred_check_branch
      %44 = sbr.rel (0) target = $region21
    $region20: #{_simplenet_apply.1} parent=1 // pred_region
      _
    $region21: #{_simplenet_apply.1} parent=1 // pred_fallthru
      _
    // Predicated region
    $region22: #{_simplenet_apply.1} parent=1 // pred_check
      _
    $region23: #{_simplenet_apply.1} parent=1 // pred_check_branch
      %46 = sbr.rel (0) target = $region25
    $region24: #{_simplenet_apply.1} parent=1 // pred_region
      %48 = dma.done [#allocation4], 2048
    $region25: #{_simplenet_apply.1} parent=1 // pred_fallthru
      _
    // Predicated region
    $region26: #{_simplenet_apply.1} parent=1 // pred_check
      _
    $region27: #{_simplenet_apply.1} parent=1 // pred_check_branch
      %50 = sbr.rel (0) target = $region29
    $region28: #{_simplenet_apply.1} parent=1 // pred_region
      %52 = dma.done [#allocation7], 2048
    $region29: #{_simplenet_apply.1} parent=1 // pred_fallthru
      _
    %p53 = scmp.eq.s32.totalorder 0, 0
    // Predicated region
    $region30: #{_simplenet_apply.1} parent=1 // pred_check
      %p54 = pneg %p53
    $region31: #{_simplenet_apply.1} parent=1 // pred_check_branch
      %56 = sbr.rel (%p54) target = $region33
    $region32: #{_simplenet_apply.1} parent=1 // pred_region
      %57 = vst [vmem:[#allocation2] sm:$0xff] 0.0
    $region33: #{_simplenet_apply.1} parent=1 // pred_fallthru
      _
    %v58 = vld [vmem:[%s0] sm:$0xff]
    %v59 = vld [vmem:[#allocation3] sm:$0xff]
    %v60 = vld [vmem:[#allocation3 + $0x8] sm:$0xff]
    %v61 = vld [vmem:[#allocation3 + $0x10] sm:$0xff]
    %v62 = vld [vmem:[#allocation3 + $0x18] sm:$0xff]
    %v63 = vld [vmem:[#allocation3 + $0x20] sm:$0xff]
    %v64 = vld [vmem:[#allocation3 + $0x28] sm:$0xff]
    %v65 = vld [vmem:[#allocation3 + $0x30] sm:$0xff]
    %v66 = vld [vmem:[#allocation3 + $0x38] sm:$0xff]
    %v67 = vld [vmem:[#allocation3 + $0x40] sm:$0xff]
    %v68 = vld [vmem:[#allocation3 + $0x48] sm:$0xff]
    %v69 = vld [vmem:[#allocation3 + $0x50] sm:$0xff]
    %v70 = vld [vmem:[#allocation3 + $0x58] sm:$0xff]
    %v71 = vld [vmem:[#allocation3 + $0x60] sm:$0xff]
    %v72 = vld [vmem:[#allocation3 + $0x68] sm:$0xff]
    %v73 = vld [vmem:[#allocation3 + $0x70] sm:$0xff]
    %v74 = vld [vmem:[#allocation3 + $0x78] sm:$0xff]
    %v75 = vld [vmem:[%s2] sm:$0x1]
    %v77 = vperm.slane %v75, 0
    %79 = vmatpush.msra.mxu0 %v74
    %80 = vmatpush.msra.mxu0 %v73
    %81 = vmatpush.msra.mxu0 %v72
    %82 = vmatpush.msra.mxu0 %v71
    %83 = vmatpush.msra.mxu0 %v70
    %84 = vmatpush.msra.mxu0 %v69
    %85 = vmatpush.msra.mxu0 %v68
    %86 = vmatpush.msra.mxu0 %v67
    %87 = vmatpush.msra.mxu0 %v66
    %88 = vmatpush.msra.mxu0 %v65
    %89 = vmatpush.msra.mxu0 %v64
    %90 = vmatpush.msra.mxu0 %v63
    %91 = vmatpush.msra.mxu0 %v62
    %92 = vmatpush.msra.mxu0 %v61
    %93 = vmatpush.msra.mxu0 %v60
    %94 = vmatpush.msra.mxu0 %v59
    %95 = vmatmul.f32.gmra.mxu0 %v58
    %v96 = vpop.f32.mrf.mxu0
    %v97 = vadd.f32 %v77, %v96
    %98 = vdwg.mxu0
    %v99 = vmax.f32 %v97, 0.0
    %v100 = vld [vmem:[#allocation2] sm:$0xff]
    %v101 = vld [vmem:[#allocation6] sm:$0xff]
    %v102 = vld [vmem:[#allocation6 + $0x8] sm:$0xff]
    %v103 = vld [vmem:[#allocation6 + $0x10] sm:$0xff]
    %v104 = vld [vmem:[#allocation6 + $0x18] sm:$0xff]
    %v105 = vld [vmem:[#allocation6 + $0x20] sm:$0xff]
    %v106 = vld [vmem:[#allocation6 + $0x28] sm:$0xff]
    %v107 = vld [vmem:[#allocation6 + $0x30] sm:$0xff]
    %v108 = vld [vmem:[#allocation6 + $0x38] sm:$0xff]
    %v109 = vld [vmem:[#allocation6 + $0x40] sm:$0xff]
    %v110 = vld [vmem:[#allocation6 + $0x48] sm:$0xff]
    %v111 = vld [vmem:[#allocation6 + $0x50] sm:$0xff]
    %v112 = vld [vmem:[#allocation6 + $0x58] sm:$0xff]
    %v113 = vld [vmem:[#allocation6 + $0x60] sm:$0xff]
    %v114 = vld [vmem:[#allocation6 + $0x68] sm:$0xff]
    %v115 = vld [vmem:[#allocation6 + $0x70] sm:$0xff]
    %v116 = vld [vmem:[#allocation6 + $0x78] sm:$0xff]
    %117 = vmatpush.msra.mxu0 %v116
    %118 = vmatpush.msra.mxu0 %v115
    %119 = vmatpush.msra.mxu0 %v114
    %120 = vmatpush.msra.mxu0 %v113
    %121 = vmatpush.msra.mxu0 %v112
    %122 = vmatpush.msra.mxu0 %v111
    %123 = vmatpush.msra.mxu0 %v110
    %124 = vmatpush.msra.mxu0 %v109
    %125 = vmatpush.msra.mxu0 %v108
    %126 = vmatpush.msra.mxu0 %v107
    %127 = vmatpush.msra.mxu0 %v106
    %128 = vmatpush.msra.mxu0 %v105
    %129 = vmatpush.msra.mxu0 %v104
    %130 = vmatpush.msra.mxu0 %v103
    %131 = vmatpush.msra.mxu0 %v102
    %132 = vmatpush.msra.mxu0 %v101
    %133 = vmatmul.f32.gmra.mxu0 %v99
    %v134 = vpop.f32.mrf.mxu0
    %v135 = vadd.f32 0.0, %v134
    %136 = vdwg.mxu0
    %v137 = vadd.f32 %v100, %v135
    %138 = vst [vmem:[#allocation2] sm:$0xff] %v137
    // Predicated region
    $region34: #{_simplenet_apply.1} parent=1 // pred_check
      %p139 = pneg %p53
    $region35: #{_simplenet_apply.1} parent=1 // pred_check_branch
      %141 = sbr.rel (%p139) target = $region37
    $region36: #{_simplenet_apply.1} parent=1 // pred_region
      %v142 = vld [vmem:[#allocation2] sm:$0xff]
      %v143 = vld [vmem:[%s4] sm:$0x1]
      %v145 = vperm.slane %v143, 0
      %v147 = vadd.f32 %v142, %v145
      %148 = vst [vmem:[#allocation8] sm:$0xff] %v147
    $region37: #{_simplenet_apply.1} parent=1 // pred_fallthru
      _
    // Predicated region
    $region38: #{_simplenet_apply.1} parent=1 // pred_check
      _
    $region39: #{_simplenet_apply.1} parent=1 // pred_check_branch
      %150 = sbr.rel (0) target = $region41
    $region40: #{_simplenet_apply.1} parent=1 // pred_region
      %152 = vsyncadd [#allocation5], 0
      %s154 = sshll.u32 [#allocation8], 4
      %s155 = int_to_ptr.vmem [resolvable:$true] %s154
      %s156 = sshll.u32 %s5, 4
      %s157 = int_to_ptr.hbm [resolvable:$true] %s156
      %159 = dma.vmem_to_hbm [thread:$0]  %s155, 128, %s157, [#allocation5]
    $region41: #{_simplenet_apply.1} parent=1 // pred_fallthru
      _
    // Predicated region
    $region42: #{_simplenet_apply.1} parent=1 // pred_check
      _
    $region43: #{_simplenet_apply.1} parent=1 // pred_check_branch
      %161 = sbr.rel (0) target = $region45
    $region44: #{_simplenet_apply.1} parent=1 // pred_region
      %163 = dma.done [#allocation5], 128
    $region45: #{_simplenet_apply.1} parent=1 // pred_fallthru
      _
    %164 = vsyncpa [#allocation4], 1
    %165 = vsyncpa [#allocation7], 1
    %166 = vsyncpa [#allocation5], 1

</llo_original>
